<compile_context>
chip_gen: v6e
topology: v6e:2x2x1
jax: 0.10.0
libtpu: 0.0.40
codegen_flags: <defaults>
</compile_context>

<pallas_src>
import math
import functools

import jax
import jax.numpy as jnp
from jax.experimental import pallas as pl
from jax.experimental.pallas import tpu as pltpu


def sam_kernel(ct_ref, ch_ref, hh_ref, res_ref, w_ref, *, inv_sqrt_d):
    # ct_ref : (TBC, HW)        c_t rows for this block
    # ch_ref : (tau, TBC, HW)   c_historys (tau outermost)
    # hh_ref : (tau, TBC, HW)   h_historys
    # res_ref: (TBC, HW)        weighted sum over tau
    # w_ref  : (tau, TBC, HW)   softmax weights
    # Fold the 1/sqrt(d) scale into c_t once (one mul per (TBC,HW) plane
    # instead of one per (tau,TBC,HW) element).  Softmax math in f32.
    ct = ct_ref[...].astype(jnp.float32) * inv_sqrt_d          # (TBC, HW)
    ch = ch_ref[...].astype(jnp.float32)                       # (tau, TBC, HW)

    scores = ch * ct                                           # broadcast over tau
    # Numerically-stable softmax over tau (leading axis -> pure VPU reduction).
    m = jnp.max(scores, axis=0, keepdims=True)                 # (1, TBC, HW)
    e = jnp.exp(scores - m)                                    # (tau, TBC, HW)
    s = jnp.sum(e, axis=0, keepdims=True)                      # (1, TBC, HW)
    w = e * pl.reciprocal(s, approx=True)                      # EUP reciprocal

    w_ref[...] = w.astype(w_ref.dtype)

    hh = hh_ref[...].astype(jnp.float32)                       # (tau, TBC, HW)
    res_ref[...] = jnp.sum(hh * w, axis=0).astype(res_ref.dtype)


def _choose_row_tile(rows, tau, hw, itemsize=4, budget_bytes=24 << 20, cap=256):
    """Pick TBC (rows of B*C per grid step).

    Working set per pipeline buffer = ct + ch + hh + w + res blocks
      = TBC * HW * itemsize * (3*tau + 2) bytes, double-buffered (x2).
    Keep it under `budget_bytes` (safe for v7x's 64 MiB VMEM), cap at `cap`
    rows, and keep >= 2 grid steps when possible so both v7x TCs get work.
    """
    if rows <= 8:
        return rows                      # full-dim block is always legal
    per_row = hw * itemsize * (3 * tau + 2)
    fit = max(8, (budget_bytes // (2 * per_row)) // 8 * 8)
    tbc = min(cap, fit)
    if rows >= 16:
        half = max(8, (((rows + 1) // 2) // 8) * 8)
        tbc = min(tbc, half)             # keep the grid >= 2 steps (v7x megacore)
    return max(8, min(tbc, (rows // 8) * 8))


def sam_forward(c_t, c_historys, h_historys):
    """Pallas implementation of SAM.forward.

    Args:
      c_t        : (B, C, H, W)
      c_historys : (B, C, tau, H, W)
      h_historys : (B, C, tau, H, W)
    Returns:
      result     : (B, C, H, W)
      weights_t  : (B, C, tau, H, W)
    """
    B, C, tau, H, W = c_historys.shape
    HW = H * W
    rows = B * C
    d = C * H * W                        # self.d = num_hidden * height * width
    inv_sqrt_d = 1.0 / math.sqrt(d)

    # tau-outermost layout (tau, B*C, HW).  NOTE: ideally the producer would
    # emit this layout directly; here the wrapper pays one XLA transpose.
    ct = c_t.reshape(rows, HW)
    ch = jnp.transpose(c_historys.reshape(rows, tau, HW), (1, 0, 2))
    hh = jnp.transpose(h_historys.reshape(rows, tau, HW), (1, 0, 2))

    tbc = _choose_row_tile(rows, tau, HW)
    rows_pad = ((rows + tbc - 1) // tbc) * tbc
    if rows_pad != rows:
        pad = rows_pad - rows
        ct = jnp.pad(ct, ((0, pad), (0, 0)))
        ch = jnp.pad(ch, ((0, 0), (0, pad), (0, 0)))
        hh = jnp.pad(hh, ((0, 0), (0, pad), (0, 0)))

    kernel = functools.partial(sam_kernel, inv_sqrt_d=inv_sqrt_d)

    res, w = pl.pallas_call(
        kernel,
        out_shape=(
            jax.ShapeDtypeStruct((rows_pad, HW), c_t.dtype),
            jax.ShapeDtypeStruct((tau, rows_pad, HW), c_t.dtype),
        ),
        grid=(rows_pad // tbc,),
        in_specs=[
            pl.BlockSpec((tbc, HW), lambda i: (i, 0)),
            pl.BlockSpec((tau, tbc, HW), lambda i: (0, i, 0)),
            pl.BlockSpec((tau, tbc, HW), lambda i: (0, i, 0)),
        ],
        out_specs=(
            pl.BlockSpec((tbc, HW), lambda i: (i, 0)),
            pl.BlockSpec((tau, tbc, HW), lambda i: (0, i, 0)),
        ),
        compiler_params=pltpu.CompilerParams(
            dimension_semantics=("parallel",),
            vmem_limit_bytes=48 * 1024 * 1024,
        ),
    )(ct, ch, hh)

    result = res[:rows].reshape(B, C, H, W)
    weights_t = jnp.transpose(w[:, :rows, :], (1, 0, 2)).reshape(B, C, tau, H, W)
    return result, weights_t


def sam_reference(c_t, c_historys, h_historys):
    """Pure-JAX reference mirroring the PyTorch code (f32 math)."""
    B, C, tau, H, W = c_historys.shape
    d = C * H * W
    scores = (c_historys.astype(jnp.float32)
              * c_t[:, :, None, :, :].astype(jnp.float32)) / math.sqrt(d)
    scores = scores - jnp.max(scores, axis=2, keepdims=True)
    e = jnp.exp(scores)
    w = e / jnp.sum(e, axis=2, keepdims=True)
    result = jnp.sum(h_historys.astype(jnp.float32) * w, axis=2)
    return result.astype(c_t.dtype), w.astype(c_t.dtype)


if __name__ == "__main__":
    # Small shapes consistent with the module: num_hidden=C, height=H, width=W.
    # rows = B*C = 16 -> row tile 8 -> grid of 2 (exercises >=2 parallel steps).
    B, C, tau, H, W = 2, 8, 6, 16, 16

    key = jax.random.PRNGKey(0)
    k1, k2, k3 = jax.random.split(key, 3)
    c_t = jax.random.normal(k1, (B, C, H, W), dtype=jnp.float32)
    c_historys = jax.random.normal(k2, (B, C, tau, H, W), dtype=jnp.float32)
    h_historys = jax.random.normal(k3, (B, C, tau, H, W), dtype=jnp.float32)

    result, weights_t = sam_forward(c_t, c_historys, h_historys)
    jax.block_until_ready((result, weights_t))

    # Sanity-check against the pure-JAX reference.  Tolerance accommodates the
    # EUP approximate reciprocal used for the softmax denominator.
    ref_result, ref_w = sam_reference(c_t, c_historys, h_historys)
    assert result.shape == (B, C, H, W)
    assert weights_t.shape == (B, C, tau, H, W)
    assert jnp.allclose(result, ref_result, atol=2e-3, rtol=2e-3)
    assert jnp.allclose(weights_t, ref_w, atol=2e-3, rtol=2e-3)

    print("KERNEL_OK")
</pallas_src>

<mosaic_0001>
module attributes {stable_mosaic.version = 11 : i64} {
  func.func @sam_kernel(%arg0: i32, %arg1: memref<8x256xf32, #tpu.memory_space<vmem>>, %arg2: memref<6x8x256xf32, #tpu.memory_space<vmem>>, %arg3: memref<6x8x256xf32, #tpu.memory_space<vmem>>, %arg4: memref<8x256xf32, #tpu.memory_space<vmem>>, %arg5: memref<6x8x256xf32, #tpu.memory_space<vmem>>) attributes {dimension_semantics = [#tpu.dimension_semantics<parallel>], iteration_bounds = array<i64: 2>, scalar_prefetch = 0 : i64, scratch_operands = 0 : i64, tpu.core_type = #tpu.core_type<tc>, window_params = [{transform_indices = @transform_0, window_bounds = array<i64: 8, 256>}, {transform_indices = @transform_1, window_bounds = array<i64: 6, 8, 256>}, {transform_indices = @transform_2, window_bounds = array<i64: 6, 8, 256>}, {transform_indices = @transform_3, window_bounds = array<i64: 8, 256>}, {transform_indices = @transform_4, window_bounds = array<i64: 6, 8, 256>}]} {
    %c0 = arith.constant 0 : index
    %c0_0 = arith.constant 0 : index
    %0 = vector.load %arg1[%c0, %c0_0] : memref<8x256xf32, #tpu.memory_space<vmem>>, vector<8x256xf32>
    %cst = arith.constant 0.0220970865 : f32
    %1 = vector.broadcast %cst : f32 to vector<8x256xf32>
    %2 = arith.mulf %0, %1 : vector<8x256xf32>
    %c0_1 = arith.constant 0 : index
    %c0_2 = arith.constant 0 : index
    %c0_3 = arith.constant 0 : index
    %3 = vector.load %arg2[%c0_1, %c0_2, %c0_3] : memref<6x8x256xf32, #tpu.memory_space<vmem>>, vector<6x8x256xf32>
    %4 = vector.shape_cast %2 : vector<8x256xf32> to vector<1x8x256xf32>
    %5 = vector.broadcast %4 : vector<1x8x256xf32> to vector<6x8x256xf32>
    %6 = arith.mulf %3, %5 : vector<6x8x256xf32>
    %cst_4 = arith.constant dense<0xFF800000> : vector<8x256xf32>
    %7 = vector.multi_reduction <maximumf>, %6, %cst_4 [0] : vector<6x8x256xf32> to vector<8x256xf32>
    %8 = vector.shape_cast %7 : vector<8x256xf32> to vector<1x8x256xf32>
    %9 = vector.broadcast %8 : vector<1x8x256xf32> to vector<6x8x256xf32>
    %10 = arith.subf %6, %9 : vector<6x8x256xf32>
    %11 = math.exp %10 : vector<6x8x256xf32>
    %cst_5 = arith.constant dense<0.000000e+00> : vector<8x256xf32>
    %12 = vector.multi_reduction <add>, %11, %cst_5 [0] : vector<6x8x256xf32> to vector<8x256xf32>
    %13 = vector.shape_cast %12 : vector<8x256xf32> to vector<1x8x256xf32>
    %14 = tpu.reciprocal %13 {approx = true} : vector<1x8x256xf32> -> vector<1x8x256xf32>
    %15 = vector.broadcast %14 : vector<1x8x256xf32> to vector<6x8x256xf32>
    %16 = arith.mulf %11, %15 : vector<6x8x256xf32>
    %c0_6 = arith.constant 0 : index
    %c0_7 = arith.constant 0 : index
    %c0_8 = arith.constant 0 : index
    %17 = vector.load %arg5[%c0_6, %c0_7, %c0_8] : memref<6x8x256xf32, #tpu.memory_space<vmem>>, vector<6x8x256xf32>
    tpu.vector_store %arg5[%c0_6, %c0_7, %c0_8], %16 {strides = array<i32>} : memref<6x8x256xf32, #tpu.memory_space<vmem>>, vector<6x8x256xf32>,
    %c0_9 = arith.constant 0 : index
    %c0_10 = arith.constant 0 : index
    %c0_11 = arith.constant 0 : index
    %18 = vector.load %arg3[%c0_9, %c0_10, %c0_11] : memref<6x8x256xf32, #tpu.memory_space<vmem>>, vector<6x8x256xf32>
    %19 = arith.mulf %18, %16 : vector<6x8x256xf32>
    %cst_12 = arith.constant dense<0.000000e+00> : vector<8x256xf32>
    %20 = vector.multi_reduction <add>, %19, %cst_12 [0] : vector<6x8x256xf32> to vector<8x256xf32>
    %c0_13 = arith.constant 0 : index
    %c0_14 = arith.constant 0 : index
    %21 = vector.load %arg4[%c0_13, %c0_14] : memref<8x256xf32, #tpu.memory_space<vmem>>, vector<8x256xf32>
    tpu.vector_store %arg4[%c0_13, %c0_14], %20 {strides = array<i32>} : memref<8x256xf32, #tpu.memory_space<vmem>>, vector<8x256xf32>,
    return
  }
  func.func @transform_0(%arg0: i32) -> (i32, i32) {
    %c0_i32 = arith.constant 0 : i32
    %c0_i32_0 = arith.constant 0 : i32
    return %arg0, %c0_i32 : i32, i32
  }
  func.func @transform_1(%arg0: i32) -> (i32, i32, i32) {
    %c0_i32 = arith.constant 0 : i32
    %c0_i32_0 = arith.constant 0 : i32
    %c0_i32_1 = arith.constant 0 : i32
    return %c0_i32, %arg0, %c0_i32_0 : i32, i32, i32
  }
  func.func @transform_2(%arg0: i32) -> (i32, i32, i32) {
    %c0_i32 = arith.constant 0 : i32
    %c0_i32_0 = arith.constant 0 : i32
    %c0_i32_1 = arith.constant 0 : i32
    return %c0_i32, %arg0, %c0_i32_0 : i32, i32, i32
  }
  func.func @transform_3(%arg0: i32) -> (i32, i32) {
    %c0_i32 = arith.constant 0 : i32
    %c0_i32_0 = arith.constant 0 : i32
    return %arg0, %c0_i32 : i32, i32
  }
  func.func @transform_4(%arg0: i32) -> (i32, i32, i32) {
    %c0_i32 = arith.constant 0 : i32
    %c0_i32_0 = arith.constant 0 : i32
    %c0_i32_1 = arith.constant 0 : i32
    return %c0_i32, %arg0, %c0_i32_0 : i32, i32, i32
  }
}

</mosaic_0001>

<llo_original>
// kernel: tpu_custom_call.1
$region0: #{tpu_custom_call.1}
  #allocation0 [shape = 'u32[]', space=smem, size = 0x4, offset = 0x4, fixed_abs, tag = 'smem constant byte address 0x4 - core index']
  #allocation1 [shape = 'u32[144,128]{1,0:T(1,128)}', space=vmem, size = 0x12000, scoped, tag = 'internal scratch']
  %s0 = inlined_call_operand.hbm [shape: f32[16,256], index: 0, kind: input, shape index: {}]
  %s1 = inlined_call_operand.hbm [shape: f32[6,16,256], index: 1, kind: input, shape index: {}]
  %s2 = inlined_call_operand.hbm [shape: f32[6,16,256], index: 2, kind: input, shape index: {}]
  %s3 = inlined_call_operand.hbm [shape: f32[16,256], index: 3, kind: output, shape index: {0}]
  %s4 = inlined_call_operand.hbm [shape: f32[6,16,256], index: 4, kind: output, shape index: {1}]
  %5 = xla_tuple %s3, %s4
  %s6 = sld [smem:[#allocation0]]
  $region65: #{tpu_custom_call.1} parent=0
    _
  %s8 = ssub.s32 1, %s6
  %s9 = scalar_select 0, %s8, %s6
  $region1: #{tpu_custom_call.1} parent=0
    #allocation2 [shape = 'u8[16384]{0}', space=vmem, size = 0x4000, scoped, tag = 'input window, operand 0']
    #allocation3 [shape = 's32[2]{0}', space=sflag, size = 0x8, scoped, tag = 'scoped memory for tpu_custom_call.1']
    #allocation4 [shape = 's32[2]{0}', space=sflag, size = 0x8, scoped, tag = 'scoped memory for tpu_custom_call.1']
    #allocation5 [shape = 'u8[98304]{0}', space=vmem, size = 0x18000, scoped, tag = 'input window, operand 1']
    #allocation6 [shape = 's32[2]{0}', space=sflag, size = 0x8, scoped, tag = 'scoped memory for tpu_custom_call.1']
    #allocation7 [shape = 'u8[98304]{0}', space=vmem, size = 0x18000, scoped, tag = 'input window, operand 2']
    #allocation8 [shape = 'u8[16384]{0}', space=vmem, size = 0x4000, scoped, tag = 'output window, operand 0']
    #allocation9 [shape = 'u8[98304]{0}', space=vmem, size = 0x18000, scoped, tag = 'output window, operand 1']
    #allocation10 [shape = 's32[2]{0}', space=sflag, size = 0x8, scoped, tag = 'scoped memory for tpu_custom_call.1']
    %10 = vsyncpa [#allocation3], 0
    %s11 = scalar_lea.sflag [#allocation3], 1
    %12 = vsyncpa %s11, 0
    %13 = vsyncpa [#allocation6], 0
    %s14 = scalar_lea.sflag [#allocation6], 1
    %15 = vsyncpa %s14, 0
    %16 = vsyncpa [#allocation4], 0
    %s17 = scalar_lea.sflag [#allocation4], 1
    %18 = vsyncpa %s17, 0
    %19 = vsyncpa [#allocation10], 0
    %s20 = scalar_lea.sflag [#allocation10], 1
    %21 = vsyncpa %s20, 0
    loop: start=0, step=1, limit=4
    $region2: #{tpu_custom_call.1} parent=1 // loop_pre_header
      _
    $region3: #{tpu_custom_call.1} parent=1 // loop_header
      %s23 = sphi 0, %s27
      %p24 = scmp.ge.s32.totalorder %s23, 4
      %s33 = sphi 0, %s35
      %s36 = sphi 0, %s33
      %s37 = sphi 0, %s36
      %s53 = sphi 0, %s37
      %s59 = sphi 0, %s61
      %s62 = sphi 0, %s59
      %s63 = sphi 0, %s62
      %s79 = sphi 0, %s63
      %s85 = sphi 0, %s87
      %s88 = sphi 0, %s85
      %s89 = sphi 0, %s88
      %s105 = sphi 0, %s89
      %s111 = sphi 0, %s113
      %s114 = sphi 0, %s111
      %s115 = sphi 0, %s114
      %s131 = sphi 0, %s115
      %s137 = sphi 0, %s139
      %s140 = sphi 0, %s137
      %s141 = sphi 0, %s140
      %s157 = sphi 0, %s141
    $region4: #{tpu_custom_call.1} parent=1 // loop_header_branch
      %26 = sbr.rel (%p24) target = $region8
    $region5: #{tpu_custom_call.1} parent=1 // loop_body
      %s28 = ssub.s32 %s23, 1
      %s29 = ssub.s32 %s23, 2
      %s30 = sadd.s32 %s23, 1
      %s31 = ssub.s32 %s23, %s30
      %p32 = scmp.eq.s32.totalorder %s31, 0
      %s34 = sadd.s32 %s33, 1
      %s35 = scalar_select %p32, %s33, %s34
      %p38 = pneg %p32
      %p39 = scmp.eq.s32.totalorder %s23, 1
      %p40 = por %p38, %p39
      %p41 = scmp.ne.s32.totalorder %s33, %s36
      %p42 = scmp.eq.s32.totalorder %s23, 0
      %p43 = por %p41, %p42
      %p44 = scmp.ne.s32.totalorder %s33, %s36
      %p45 = scmp.eq.s32.totalorder %s28, 1
      %p46 = por %p44, %p45
      %p47 = scmp.ne.s32.totalorder %s36, %s37
      %p48 = scmp.eq.s32.totalorder %s28, 0
      %p49 = por %p47, %p48
      %p50 = scmp.ne.s32.totalorder %s36, %s37
      %p51 = scmp.eq.s32.totalorder %s29, 1
      %p52 = por %p50, %p51
      %p54 = scmp.ne.s32.totalorder %s37, %s53
      %p55 = scmp.eq.s32.totalorder %s29, 0
      %p56 = por %p54, %p55
      %s57 = ssub.s32 %s23, %s30
      %p58 = scmp.eq.s32.totalorder %s57, 0
      %s60 = sadd.s32 %s59, 1
      %s61 = scalar_select %p58, %s59, %s60
      %p64 = pneg %p58
      %p65 = scmp.eq.s32.totalorder %s23, 1
      %p66 = por %p64, %p65
      %p67 = scmp.ne.s32.totalorder %s59, %s62
      %p68 = scmp.eq.s32.totalorder %s23, 0
      %p69 = por %p67, %p68
      %p70 = scmp.ne.s32.totalorder %s59, %s62
      %p71 = scmp.eq.s32.totalorder %s28, 1
      %p72 = por %p70, %p71
      %p73 = scmp.ne.s32.totalorder %s62, %s63
      %p74 = scmp.eq.s32.totalorder %s28, 0
      %p75 = por %p73, %p74
      %p76 = scmp.ne.s32.totalorder %s62, %s63
      %p77 = scmp.eq.s32.totalorder %s29, 1
      %p78 = por %p76, %p77
      %p80 = scmp.ne.s32.totalorder %s63, %s79
      %p81 = scmp.eq.s32.totalorder %s29, 0
      %p82 = por %p80, %p81
      %s83 = ssub.s32 %s23, %s30
      %p84 = scmp.eq.s32.totalorder %s83, 0
      %s86 = sadd.s32 %s85, 1
      %s87 = scalar_select %p84, %s85, %s86
      %p90 = pneg %p84
      %p91 = scmp.eq.s32.totalorder %s23, 1
      %p92 = por %p90, %p91
      %p93 = scmp.ne.s32.totalorder %s85, %s88
      %p94 = scmp.eq.s32.totalorder %s23, 0
      %p95 = por %p93, %p94
      %p96 = scmp.ne.s32.totalorder %s85, %s88
      %p97 = scmp.eq.s32.totalorder %s28, 1
      %p98 = por %p96, %p97
      %p99 = scmp.ne.s32.totalorder %s88, %s89
      %p100 = scmp.eq.s32.totalorder %s28, 0
      %p101 = por %p99, %p100
      %p102 = scmp.ne.s32.totalorder %s88, %s89
      %p103 = scmp.eq.s32.totalorder %s29, 1
      %p104 = por %p102, %p103
      %p106 = scmp.ne.s32.totalorder %s89, %s105
      %p107 = scmp.eq.s32.totalorder %s29, 0
      %p108 = por %p106, %p107
      %s109 = ssub.s32 %s23, %s30
      %p110 = scmp.eq.s32.totalorder %s109, 0
      %s112 = sadd.s32 %s111, 1
      %s113 = scalar_select %p110, %s111, %s112
      %p116 = pneg %p110
      %p117 = scmp.eq.s32.totalorder %s23, 1
      %p118 = por %p116, %p117
      %p119 = scmp.ne.s32.totalorder %s111, %s114
      %p120 = scmp.eq.s32.totalorder %s23, 0
      %p121 = por %p119, %p120
      %p122 = scmp.ne.s32.totalorder %s111, %s114
      %p123 = scmp.eq.s32.totalorder %s28, 1
      %p124 = por %p122, %p123
      %p125 = scmp.ne.s32.totalorder %s114, %s115
      %p126 = scmp.eq.s32.totalorder %s28, 0
      %p127 = por %p125, %p126
      %p128 = scmp.ne.s32.totalorder %s114, %s115
      %p129 = scmp.eq.s32.totalorder %s29, 1
      %p130 = por %p128, %p129
      %p132 = scmp.ne.s32.totalorder %s115, %s131
      %p133 = scmp.eq.s32.totalorder %s29, 0
      %p134 = por %p132, %p133
      %s135 = ssub.s32 %s23, %s30
      %p136 = scmp.eq.s32.totalorder %s135, 0
      %s138 = sadd.s32 %s137, 1
      %s139 = scalar_select %p136, %s137, %s138
      %p142 = pneg %p136
      %p143 = scmp.eq.s32.totalorder %s23, 1
      %p144 = por %p142, %p143
      %p145 = scmp.ne.s32.totalorder %s137, %s140
      %p146 = scmp.eq.s32.totalorder %s23, 0
      %p147 = por %p145, %p146
      %p148 = scmp.ne.s32.totalorder %s137, %s140
      %p149 = scmp.eq.s32.totalorder %s28, 1
      %p150 = por %p148, %p149
      %p151 = scmp.ne.s32.totalorder %s140, %s141
      %p152 = scmp.eq.s32.totalorder %s28, 0
      %p153 = por %p151, %p152
      %p154 = scmp.ne.s32.totalorder %s140, %s141
      %p155 = scmp.eq.s32.totalorder %s29, 1
      %p156 = por %p154, %p155
      %p158 = scmp.ne.s32.totalorder %s141, %s157
      %p159 = scmp.eq.s32.totalorder %s29, 0
      %p160 = por %p158, %p159
      %p161 = scmp.le.s32.totalorder 1, %s23
      %p162 = scmp.lt.s32.totalorder %s23, 3
      %p163 = pnand %p161, %p162
      %p164 = pneg %p163
      // Predicated region
      $region9: #{tpu_custom_call.1} parent=5 // pred_check
        _
      $region10: #{tpu_custom_call.1} parent=5 // pred_check_branch
        %166 = sbr.rel (%p163) target = $region12
      $region11: #{tpu_custom_call.1} parent=5 // pred_region
        %s167 = ssub.s32 %s23, 1
      $region12: #{tpu_custom_call.1} parent=5 // pred_fallthru
        _
      %p168 = scmp.lt.s32.totalorder %s23, 2
      // Predicated region
      $region13: #{tpu_custom_call.1} parent=5 // pred_check
        %p169 = pneg %p168
      $region14: #{tpu_custom_call.1} parent=5 // pred_check_branch
        %171 = sbr.rel (%p169) target = $region16
      $region15: #{tpu_custom_call.1} parent=5 // pred_region
        // Predicated region
        $region17: #{tpu_custom_call.1} parent=15 // pred_check
          %p172 = pneg %p43
        $region18: #{tpu_custom_call.1} parent=15 // pred_check_branch
          %174 = sbr.rel (%p172) target = $region20
        $region19: #{tpu_custom_call.1} parent=15 // pred_region
          %s175 = sand.u32 %s33, 1
          %s176 = scalar_lea.sflag [#allocation3], %s175
          %s177 = sand.u32 %s33, 1
          %s178 = smul.addr %s177, 16
          %s179 = scalar_lea.vmem [#allocation2], %s178
          %s181 = ssub.s32 256, 256
          %182 = vsyncadd %s176, %s181
          %s183 = smul.addr %s23, 2
          %s184 = smul.addr %s183, 128
          %s185 = scalar_lea.hbm %s0, %s184
          %s187 = sshll.u32 %s179, 4
          %s188 = int_to_ptr.vmem [resolvable:$true] %s187
          %190 = dma.hbm_to_vmem [thread:$0]  %s185, 256, %s188, %s176
        $region20: #{tpu_custom_call.1} parent=15 // pred_fallthru
          _
        // Predicated region
        $region21: #{tpu_custom_call.1} parent=15 // pred_check
          %p191 = pneg %p69
        $region22: #{tpu_custom_call.1} parent=15 // pred_check_branch
          %193 = sbr.rel (%p191) target = $region24
        $region23: #{tpu_custom_call.1} parent=15 // pred_region
          %s194 = sand.u32 %s23, 1
          %s195 = scalar_lea.sflag [#allocation6], %s194
          %s196 = sand.u32 %s59, 1
          %s197 = smul.addr %s196, 96
          %s198 = scalar_lea.vmem [#allocation5], %s197
          %s200 = ssub.s32 1536, 1536
          %201 = vsyncadd %s195, %s200
          %s202 = smul.addr %s23, 2
          %s203 = smul.addr %s202, 128
          %s204 = scalar_lea.hbm %s1, %s203
          %s205 = sshll.u32 %s198, 4
          %s206 = int_to_ptr.vmem [resolvable:$true] %s205
          %211 = dma.hbm_to_vmem [thread:$0]  %s204, 1536, %s206, %s195, 512, 256, 16
        $region24: #{tpu_custom_call.1} parent=15 // pred_fallthru
          _
        // Predicated region
        $region25: #{tpu_custom_call.1} parent=15 // pred_check
          %p212 = pneg %p95
        $region26: #{tpu_custom_call.1} parent=15 // pred_check_branch
          %214 = sbr.rel (%p212) target = $region28
        $region27: #{tpu_custom_call.1} parent=15 // pred_region
          %s215 = sand.u32 %s23, 1
          %s216 = scalar_lea.sflag [#allocation6], %s215
          %s217 = sand.u32 %s85, 1
          %s218 = smul.addr %s217, 96
          %s219 = scalar_lea.vmem [#allocation7], %s218
          %s221 = ssub.s32 1536, 1536
          %222 = vsyncadd %s216, %s221
          %s223 = smul.addr %s23, 2
          %s224 = smul.addr %s223, 128
          %s225 = scalar_lea.hbm %s2, %s224
          %s226 = sshll.u32 %s219, 4
          %s227 = int_to_ptr.vmem [resolvable:$true] %s226
          %232 = dma.hbm_to_vmem [thread:$0]  %s225, 1536, %s227, %s216, 512, 256, 16
        $region28: #{tpu_custom_call.1} parent=15 // pred_fallthru
          _
      $region16: #{tpu_custom_call.1} parent=5 // pred_fallthru
        _
      %p233 = scmp.le.s32.totalorder 1, %s23
      %p234 = scmp.lt.s32.totalorder %s23, 3
      %p235 = pnand %p233, %p234
      %p236 = pneg %p235
      // Predicated region
      $region29: #{tpu_custom_call.1} parent=5 // pred_check
        _
      $region30: #{tpu_custom_call.1} parent=5 // pred_check_branch
        %238 = sbr.rel (%p235) target = $region32
      $region31: #{tpu_custom_call.1} parent=5 // pred_region
        %s239 = ssub.s32 %s23, 1
        %s240 = sand.u32 %s36, 1
        %s241 = scalar_lea.sflag [#allocation3], %s240
        %s242 = sand.u32 %s36, 1
        %s243 = smul.addr %s242, 16
        %s244 = scalar_lea.vmem [#allocation2], %s243
        // Predicated region
        $region33: #{tpu_custom_call.1} parent=31 // pred_check
          %p245 = pneg %p49
        $region34: #{tpu_custom_call.1} parent=31 // pred_check_branch
          %247 = sbr.rel (%p245) target = $region36
        $region35: #{tpu_custom_call.1} parent=31 // pred_region
          %248 = dma.done %s241, 256
        $region36: #{tpu_custom_call.1} parent=31 // pred_fallthru
          _
        %s249 = sand.u32 %s28, 1
        %s250 = scalar_lea.sflag [#allocation6], %s249
        %s251 = sand.u32 %s62, 1
        %s252 = smul.addr %s251, 96
        %s253 = scalar_lea.vmem [#allocation5], %s252
        // Predicated region
        $region37: #{tpu_custom_call.1} parent=31 // pred_check
          %p254 = pneg %p75
        $region38: #{tpu_custom_call.1} parent=31 // pred_check_branch
          %256 = sbr.rel (%p254) target = $region40
        $region39: #{tpu_custom_call.1} parent=31 // pred_region
          %257 = dma.done %s250, 1536
        $region40: #{tpu_custom_call.1} parent=31 // pred_fallthru
          _
        %s258 = sand.u32 %s28, 1
        %s259 = scalar_lea.sflag [#allocation6], %s258
        %s260 = sand.u32 %s88, 1
        %s261 = smul.addr %s260, 96
        %s262 = scalar_lea.vmem [#allocation7], %s261
        // Predicated region
        $region41: #{tpu_custom_call.1} parent=31 // pred_check
          %p263 = pneg %p101
        $region42: #{tpu_custom_call.1} parent=31 // pred_check_branch
          %265 = sbr.rel (%p263) target = $region44
        $region43: #{tpu_custom_call.1} parent=31 // pred_region
          %266 = dma.done %s259, 1536
        $region44: #{tpu_custom_call.1} parent=31 // pred_fallthru
          _
        %s267 = sand.u32 %s36, 1
        %s268 = scalar_lea.sflag [#allocation3], %s267
        %s269 = sand.u32 %s36, 1
        %s270 = smul.addr %s269, 16
        %s271 = scalar_lea.vmem [#allocation2], %s270
        %p272 = pneg %p49
        %p273 = pneg %p46
        %s274 = sand.u32 %s28, 1
        %s275 = scalar_lea.sflag [#allocation6], %s274
        %s276 = sand.u32 %s62, 1
        %s277 = smul.addr %s276, 96
        %s278 = scalar_lea.vmem [#allocation5], %s277
        %p279 = pneg %p75
        %p280 = pneg %p72
        %s281 = sand.u32 %s28, 1
        %s282 = scalar_lea.sflag [#allocation6], %s281
        %s283 = sand.u32 %s88, 1
        %s284 = smul.addr %s283, 96
        %s285 = scalar_lea.vmem [#allocation7], %s284
        %p286 = pneg %p101
        %p287 = pneg %p98
        %p288 = pneg %p127
        %p289 = pneg %p124
        %s290 = sand.u32 %s114, 1
        %s291 = scalar_lea.sflag [#allocation4], %s290
        %s292 = sand.u32 %s114, 1
        %s293 = smul.addr %s292, 16
        %s294 = scalar_lea.vmem [#allocation8], %s293
        %p295 = pneg %p153
        %p296 = pneg %p150
        %s297 = sand.u32 %s140, 1
        %s298 = scalar_lea.sflag [#allocation10], %s297
        %s299 = sand.u32 %s140, 1
        %s300 = smul.addr %s299, 96
        %s301 = scalar_lea.vmem [#allocation9], %s300
        %v302 = vld [vmem:[%s244] sm:$0xff]
        %v303 = vld [vmem:[%s244 + $0x8] sm:$0xff]
        %v304 = vmul.f32 %v302, 0.022097087
        %v305 = vmul.f32 %v303, 0.022097087
        %v306 = vld [vmem:[%s253] sm:$0xff]
        %v307 = vld [vmem:[%s253 + $0x8] sm:$0xff]
        %v308 = vld [vmem:[%s253 + $0x10] sm:$0xff]
        %v309 = vld [vmem:[%s253 + $0x18] sm:$0xff]
        %v310 = vld [vmem:[%s253 + $0x20] sm:$0xff]
        %v311 = vld [vmem:[%s253 + $0x28] sm:$0xff]
        %v312 = vld [vmem:[%s253 + $0x30] sm:$0xff]
        %v313 = vld [vmem:[%s253 + $0x38] sm:$0xff]
        %v314 = vld [vmem:[%s253 + $0x40] sm:$0xff]
        %v315 = vld [vmem:[%s253 + $0x48] sm:$0xff]
        %v316 = vld [vmem:[%s253 + $0x50] sm:$0xff]
        %v317 = vld [vmem:[%s253 + $0x58] sm:$0xff]
        %v318 = vmul.f32 %v306, %v304
        %v319 = vmul.f32 %v307, %v305
        %v320 = vmul.f32 %v308, %v304
        %v321 = vmul.f32 %v309, %v305
        %v322 = vmul.f32 %v310, %v304
        %v323 = vmul.f32 %v311, %v305
        %v324 = vmul.f32 %v312, %v304
        %v325 = vmul.f32 %v313, %v305
        %v326 = vmul.f32 %v314, %v304
        %v327 = vmul.f32 %v315, %v305
        %v328 = vmul.f32 %v316, %v304
        %v329 = vmul.f32 %v317, %v305
        %v330 = vmax.f32 %v318, %v322
        %v331 = vmax.f32 %v320, %v324
        %v332 = vmax.f32 %v330, %v326
        %v333 = vmax.f32 %v331, %v328
        %v334 = vmax.f32 %v332, %v333
        %v335 = vmax.f32 %v319, %v323
        %v336 = vmax.f32 %v321, %v325
        %v337 = vmax.f32 %v335, %v327
        %v338 = vmax.f32 %v336, %v329
        %v339 = vmax.f32 %v337, %v338
        %v340 = vsub.f32 %v318, %v334
        %v341 = vsub.f32 %v319, %v339
        %v342 = vsub.f32 %v320, %v334
        %v343 = vsub.f32 %v321, %v339
        %v344 = vsub.f32 %v322, %v334
        %v345 = vsub.f32 %v323, %v339
        %v346 = vsub.f32 %v324, %v334
        %v347 = vsub.f32 %v325, %v339
        %v348 = vsub.f32 %v326, %v334
        %v349 = vsub.f32 %v327, %v339
        %v350 = vsub.f32 %v328, %v334
        %v351 = vsub.f32 %v329, %v339
        %v352 = vmul.f32 %v340, 1.442695
        %v353 = vpow.pop %v352
        %v354 = vmul.f32 %v341, 1.442695
        %v355 = vpow.pop %v354
        %v356 = vmul.f32 %v342, 1.442695
        %v357 = vpow.pop %v356
        %v358 = vmul.f32 %v343, 1.442695
        %v359 = vpow.pop %v358
        %v360 = vmul.f32 %v344, 1.442695
        %v361 = vpow.pop %v360
        %v362 = vmul.f32 %v345, 1.442695
        %v363 = vpow.pop %v362
        %v364 = vmul.f32 %v346, 1.442695
        %v365 = vpow.pop %v364
        %v366 = vmul.f32 %v347, 1.442695
        %v367 = vpow.pop %v366
        %v368 = vmul.f32 %v348, 1.442695
        %v369 = vpow.pop %v368
        %v370 = vmul.f32 %v349, 1.442695
        %v371 = vpow.pop %v370
        %v372 = vmul.f32 %v350, 1.442695
        %v373 = vpow.pop %v372
        %v374 = vmul.f32 %v351, 1.442695
        %v375 = vpow.pop %v374
        %v376 = vadd.f32 %v353, %v357
        %v377 = vadd.f32 %v376, %v361
        %v378 = vadd.f32 %v377, %v365
        %v379 = vadd.f32 %v378, %v369
        %v380 = vadd.f32 %v379, %v373
        %v381 = vadd.f32 %v355, %v359
        %v382 = vadd.f32 %v381, %v363
        %v383 = vadd.f32 %v382, %v367
        %v384 = vadd.f32 %v383, %v371
        %v385 = vadd.f32 %v384, %v375
        %v386 = vrcp.pop %v380
        %v387 = vrcp.pop %v385
        %v388 = vmul.f32 %v353, %v386
        %v389 = vmul.f32 %v355, %v387
        %v390 = vmul.f32 %v357, %v386
        %v391 = vmul.f32 %v359, %v387
        %v392 = vmul.f32 %v361, %v386
        %v393 = vmul.f32 %v363, %v387
        %v394 = vmul.f32 %v365, %v386
        %v395 = vmul.f32 %v367, %v387
        %v396 = vmul.f32 %v369, %v386
        %v397 = vmul.f32 %v371, %v387
        %v398 = vmul.f32 %v373, %v386
        %v399 = vmul.f32 %v375, %v387
        %400 = vst [vmem:[%s301] sm:$0xff] %v388
        %401 = vst [vmem:[%s301 + $0x8] sm:$0xff] %v389
        %402 = vst [vmem:[%s301 + $0x10] sm:$0xff] %v390
        %403 = vst [vmem:[%s301 + $0x18] sm:$0xff] %v391
        %404 = vst [vmem:[%s301 + $0x20] sm:$0xff] %v392
        %405 = vst [vmem:[%s301 + $0x28] sm:$0xff] %v393
        %406 = vst [vmem:[%s301 + $0x30] sm:$0xff] %v394
        %407 = vst [vmem:[%s301 + $0x38] sm:$0xff] %v395
        %408 = vst [vmem:[%s301 + $0x40] sm:$0xff] %v396
        %409 = vst [vmem:[%s301 + $0x48] sm:$0xff] %v397
        %410 = vst [vmem:[%s301 + $0x50] sm:$0xff] %v398
        %411 = vst [vmem:[%s301 + $0x58] sm:$0xff] %v399
        %v412 = vld [vmem:[%s262] sm:$0xff]
        %v413 = vld [vmem:[%s262 + $0x8] sm:$0xff]
        %v414 = vld [vmem:[%s262 + $0x10] sm:$0xff]
        %v415 = vld [vmem:[%s262 + $0x18] sm:$0xff]
        %v416 = vld [vmem:[%s262 + $0x20] sm:$0xff]
        %v417 = vld [vmem:[%s262 + $0x28] sm:$0xff]
        %v418 = vld [vmem:[%s262 + $0x30] sm:$0xff]
        %v419 = vld [vmem:[%s262 + $0x38] sm:$0xff]
        %v420 = vld [vmem:[%s262 + $0x40] sm:$0xff]
        %v421 = vld [vmem:[%s262 + $0x48] sm:$0xff]
        %v422 = vld [vmem:[%s262 + $0x50] sm:$0xff]
        %v423 = vld [vmem:[%s262 + $0x58] sm:$0xff]
        %v424 = vmul.f32 %v412, %v388
        %v425 = vmul.f32 %v413, %v389
        %v426 = vmul.f32 %v414, %v390
        %v427 = vmul.f32 %v415, %v391
        %v428 = vmul.f32 %v416, %v392
        %v429 = vmul.f32 %v417, %v393
        %v430 = vmul.f32 %v418, %v394
        %v431 = vmul.f32 %v419, %v395
        %v432 = vmul.f32 %v420, %v396
        %v433 = vmul.f32 %v421, %v397
        %v434 = vmul.f32 %v422, %v398
        %v435 = vmul.f32 %v423, %v399
        %v436 = vadd.f32 %v424, %v426
        %v437 = vadd.f32 %v436, %v428
        %v438 = vadd.f32 %v437, %v430
        %v439 = vadd.f32 %v438, %v432
        %v440 = vadd.f32 %v439, %v434
        %v441 = vadd.f32 %v425, %v427
        %v442 = vadd.f32 %v441, %v429
        %v443 = vadd.f32 %v442, %v431
        %v444 = vadd.f32 %v443, %v433
        %v445 = vadd.f32 %v444, %v435
        %446 = vst [vmem:[%s294] sm:$0xff] %v440
        %447 = vst [vmem:[%s294 + $0x8] sm:$0xff] %v445
        %s448 = sand.u32 %s114, 1
        %s449 = scalar_lea.sflag [#allocation4], %s448
        %s450 = sand.u32 %s114, 1
        %s451 = smul.addr %s450, 16
        %s452 = scalar_lea.vmem [#allocation8], %s451
        %s453 = sand.u32 %s140, 1
        %s454 = scalar_lea.sflag [#allocation10], %s453
        %s455 = sand.u32 %s140, 1
        %s456 = smul.addr %s455, 96
        %s457 = scalar_lea.vmem [#allocation9], %s456
        // Predicated region
        $region45: #{tpu_custom_call.1} parent=31 // pred_check
          %p458 = pneg %p124
        $region46: #{tpu_custom_call.1} parent=31 // pred_check_branch
          %460 = sbr.rel (%p458) target = $region48
        $region47: #{tpu_custom_call.1} parent=31 // pred_region
          %s462 = ssub.s32 256, 256
          %463 = vsyncadd %s449, %s462
          %s464 = smul.addr %s28, 2
          %s465 = smul.addr %s464, 128
          %s466 = scalar_lea.hbm %s3, %s465
          %s468 = sshll.u32 %s452, 4
          %s469 = int_to_ptr.vmem [resolvable:$true] %s468
          %471 = dma.vmem_to_hbm [thread:$0]  %s469, 256, %s466, %s449
        $region48: #{tpu_custom_call.1} parent=31 // pred_fallthru
          _
        // Predicated region
        $region49: #{tpu_custom_call.1} parent=31 // pred_check
          %p472 = pneg %p150
        $region50: #{tpu_custom_call.1} parent=31 // pred_check_branch
          %474 = sbr.rel (%p472) target = $region52
        $region51: #{tpu_custom_call.1} parent=31 // pred_region
          %s476 = ssub.s32 1536, 1536
          %477 = vsyncadd %s454, %s476
          %s478 = smul.addr %s28, 2
          %s479 = smul.addr %s478, 128
          %s480 = scalar_lea.hbm %s4, %s479
          %s481 = sshll.u32 %s457, 4
          %s482 = int_to_ptr.vmem [resolvable:$true] %s481
          %487 = dma.vmem_to_hbm [thread:$0]  %s482, 1536, %s480, %s454, 256, 512, 16
        $region52: #{tpu_custom_call.1} parent=31 // pred_fallthru
          _
      $region32: #{tpu_custom_call.1} parent=5 // pred_fallthru
        _
      %p488 = scmp.le.s32.totalorder 2, %s23
      // Predicated region
      $region53: #{tpu_custom_call.1} parent=5 // pred_check
        %p489 = pneg %p488
      $region54: #{tpu_custom_call.1} parent=5 // pred_check_branch
        %491 = sbr.rel (%p489) target = $region56
      $region55: #{tpu_custom_call.1} parent=5 // pred_region
        %s492 = ssub.s32 %s23, 2
        // Predicated region
        $region57: #{tpu_custom_call.1} parent=55 // pred_check
          %p493 = pneg %p130
        $region58: #{tpu_custom_call.1} parent=55 // pred_check_branch
          %495 = sbr.rel (%p493) target = $region60
        $region59: #{tpu_custom_call.1} parent=55 // pred_region
          %s496 = sand.u32 %s115, 1
          %s497 = scalar_lea.sflag [#allocation4], %s496
          %s498 = sand.u32 %s115, 1
          %s499 = smul.addr %s498, 16
          %s500 = scalar_lea.vmem [#allocation8], %s499
          %501 = dma.done %s497, 256
        $region60: #{tpu_custom_call.1} parent=55 // pred_fallthru
          _
        // Predicated region
        $region61: #{tpu_custom_call.1} parent=55 // pred_check
          %p502 = pneg %p156
        $region62: #{tpu_custom_call.1} parent=55 // pred_check_branch
          %504 = sbr.rel (%p502) target = $region64
        $region63: #{tpu_custom_call.1} parent=55 // pred_region
          %s505 = sand.u32 %s141, 1
          %s506 = scalar_lea.sflag [#allocation10], %s505
          %s507 = sand.u32 %s141, 1
          %s508 = smul.addr %s507, 96
          %s509 = scalar_lea.vmem [#allocation9], %s508
          %510 = dma.done %s506, 1536
        $region64: #{tpu_custom_call.1} parent=55 // pred_fallthru
          _
      $region56: #{tpu_custom_call.1} parent=5 // pred_fallthru
        _
    $region6: #{tpu_custom_call.1} parent=1 // loop_footer
      %s27 = sadd.s32 1, %s23
    $region7: #{tpu_custom_call.1} parent=1 // loop_footer_branch
      %22 = sbr.rel target = $region3
    $region8: #{tpu_custom_call.1} parent=1 // loop_exit
      _
    %511 = vsyncpa [#allocation3], 1
    %s512 = scalar_lea.sflag [#allocation3], 1
    %513 = vsyncpa %s512, 1
    %514 = vsyncpa [#allocation6], 1
    %s515 = scalar_lea.sflag [#allocation6], 1
    %516 = vsyncpa %s515, 1
    %517 = vsyncpa [#allocation4], 1
    %s518 = scalar_lea.sflag [#allocation4], 1
    %519 = vsyncpa %s518, 1
    %520 = vsyncpa [#allocation10], 1
    %s521 = scalar_lea.sflag [#allocation10], 1
    %522 = vsyncpa %s521, 1

</llo_original>
